<compile_context>
chip_gen: v5e
topology: v5e:2x2
jax: 0.10.0
libtpu: 0.0.40
codegen_flags: <defaults>
</compile_context>

<pallas_src>
import jax
import jax.numpy as jnp
from jax.experimental import pallas as pl
from jax.experimental.pallas import tpu as pltpu


def _initconv_kernel(x_ref, wa_ref, wb_ref, p_ref, o_ref):
    # x_ref:  (tn, C_in)   bf16 latent rows
    # wa_ref: (C_in, td)   bf16 first-GLU-half weight columns
    # wb_ref: (C_in, td)   bf16 gate-half weight columns
    # p_ref:  (4, td) f32  rows = [scale_a, shift_a, scale_b, shift_b]
    # o_ref:  (tn, td)
    x = x_ref[...]
    a = jnp.dot(x, wa_ref[...], preferred_element_type=jnp.float32)
    b = jnp.dot(x, wb_ref[...], preferred_element_type=jnp.float32)
    ya = a * p_ref[0:1, :] + p_ref[1:2, :]          # folded conv-bias + BatchNorm affine (f32)
    yb = b * p_ref[2:3, :] + p_ref[3:4, :]
    o_ref[...] = (ya * jax.nn.sigmoid(yb)).astype(o_ref.dtype)   # GLU(dim=1)


def _pick_row_tile(n, cap, align):
    """Largest aligned row tile <= cap that divides n (full n if small)."""
    if n <= cap:
        return n
    t = (cap // align) * align
    while t >= align:
        if n % t == 0:
            return t
        t -= align
    return (cap // align) * align   # ragged rows: cdiv grid, sublane-masked only


def _pick_col_tile(dh, cap=2048):
    """Largest multiple of 128 that divides dh and is <= cap (dh must be 128-aligned)."""
    best = 128
    t = 128
    while t <= min(dh, cap):
        if dh % t == 0:
            best = t
        t += 128
    return best


def init_conv(x, w, b, gamma, beta, running_mean, running_var, *,
              eps=1e-5, compute_dtype=jnp.bfloat16, out_dtype=None):
    """InitConv.forward (num_classes == 0): GLU(BN(ConvTranspose2d(x, k=4)))."""
    N, C_in, H, W = x.shape
    # TODO(synk): general spatial ConvTranspose2d is not implemented; lightweight_gan
    # only ever feeds the (N, latent_dim, 1, 1) latent into InitConv.
    assert H == 1 and W == 1, "InitConv expects the (N, latent_dim, 1, 1) latent"
    C2, KH, KW = w.shape[1], w.shape[2], w.shape[3]   # (C_in, 2*latent, 4, 4)
    C_half = C2 // 2
    Dh = C_half * KH * KW                             # lane-dense half width
    out_dtype = x.dtype if out_dtype is None else out_dtype

    x2 = x.reshape(N, C_in).astype(compute_dtype)
    wmat = w.reshape(C_in, C2 * KH * KW).astype(compute_dtype)  # col = o*16 + kh*4 + kw

    # Fold conv bias + eval-mode BatchNorm into a per-channel affine, expanded per
    # output column (each channel repeats over the 16 spatial positions).
    # TODO(synk): training-mode BatchNorm (batch statistics) is not computed here.
    scale = (gamma / jnp.sqrt(running_var + eps)).astype(jnp.float32)
    shift = ((b - running_mean) * scale + beta).astype(jnp.float32)
    scale_cols = jnp.repeat(scale, KH * KW)
    shift_cols = jnp.repeat(shift, KH * KW)

    if Dh % 128 == 0:
        # Main path: no wrapper-side weight slices.  Pass wmat for both GLU halves;
        # the gate half is addressed by a block-offset in its index_map.
        Dh_p = Dh
        A, B = wmat, wmat
        params = jnp.stack(
            [scale_cols[:Dh], shift_cols[:Dh], scale_cols[Dh:], shift_cols[Dh:]], axis=0
        )
        off_b_cols = Dh
    else:
        # Rare fallback (latent_dim not a multiple of 8): pad each half to a 128
        # multiple; padded scale/shift are zero so padded lanes compute 0*sigmoid(0).
        Dh_p = ((Dh + 127) // 128) * 128
        pad = Dh_p - Dh
        A = jnp.pad(wmat[:, :Dh], ((0, 0), (0, pad)))
        B = jnp.pad(wmat[:, Dh:], ((0, 0), (0, pad)))
        params = jnp.stack(
            [jnp.pad(scale_cols[:Dh], (0, pad)), jnp.pad(shift_cols[:Dh], (0, pad)),
             jnp.pad(scale_cols[Dh:], (0, pad)), jnp.pad(shift_cols[Dh:], (0, pad))],
            axis=0,
        )
        off_b_cols = 0

    sub_align = 16 if jnp.dtype(compute_dtype).itemsize < 4 else 8
    tn = _pick_row_tile(N, 256, sub_align)
    td = _pick_col_tile(Dh_p, 2048)
    n_i = pl.cdiv(N, tn)
    n_j = Dh_p // td
    if n_i * n_j < 2 and td % 256 == 0:
        td //= 2                      # keep >=2 parallel steps so both v7x TCs are used
        n_j = Dh_p // td
    off_b = off_b_cols // td          # block offset of the gate half inside A/B's buffer

    grid = (n_j, n_i)                 # weight axis outermost: weights streamed once

    cdtype_size = jnp.dtype(compute_dtype).itemsize
    bytes_accessed = int(
        x2.size * cdtype_size
        + wmat.size * cdtype_size          # weight matrix read exactly once
        + params.size * 4
        + N * Dh_p * jnp.dtype(out_dtype).itemsize
    )
    cost = pl.CostEstimate(
        flops=int(4 * N * C_in * Dh_p + 6 * N * Dh_p),   # two GEMMs + affine/gate
        transcendentals=int(N * Dh_p),                   # sigmoid
        bytes_accessed=bytes_accessed,
    )

    out2 = pl.pallas_call(
        _initconv_kernel,
        out_shape=jax.ShapeDtypeStruct((N, Dh_p), out_dtype),
        grid=grid,
        in_specs=[
            pl.BlockSpec((tn, C_in), lambda j, i: (i, 0)),          # x rows (tiny, re-fetched)
            pl.BlockSpec((C_in, td), lambda j, i: (0, j)),          # first GLU half
            pl.BlockSpec((C_in, td), lambda j, i: (0, j + off_b)),  # gate half (offset blocks)
            pl.BlockSpec((4, td), lambda j, i: (0, j)),             # folded affine params
        ],
        out_specs=pl.BlockSpec((tn, td), lambda j, i: (i, j)),
        compiler_params=pltpu.CompilerParams(
            dimension_semantics=("parallel", "parallel"),
            vmem_limit_bytes=32 * 1024 * 1024,
        ),
        cost_estimate=cost,
    )(x2, A, B, params)

    if Dh_p != Dh:
        out2 = out2[:, :Dh]
    return out2.reshape(N, C_half, KH, KW)


def _ref_forward(x, w, b, gamma, beta, mean, var, eps=1e-5, compute_dtype=jnp.float32):
    """Plain-JAX reference of the PyTorch forward (eval-mode BatchNorm)."""
    xc = x[:, :, 0, 0].astype(compute_dtype)
    wc = w.astype(compute_dtype)
    y = jnp.einsum("ni,iokl->nokl", xc, wc, preferred_element_type=jnp.float32)
    y = y + b[None, :, None, None]
    s = gamma / jnp.sqrt(var + eps)
    y = (y - mean[None, :, None, None]) * s[None, :, None, None] + beta[None, :, None, None]
    C2 = y.shape[1]
    a, g = y[:, : C2 // 2], y[:, C2 // 2 :]
    return a * jax.nn.sigmoid(g)


if __name__ == "__main__":
    key = jax.random.PRNGKey(0)
    k1, k2, k3, k4, k5, k6, k7 = jax.random.split(key, 7)

    latent_dim, N = 32, 2
    x = jax.random.normal(k1, (N, latent_dim, 1, 1), dtype=jnp.float32)
    w = 0.05 * jax.random.normal(k2, (latent_dim, 2 * latent_dim, 4, 4), dtype=jnp.float32)
    b = 0.05 * jax.random.normal(k3, (2 * latent_dim,), dtype=jnp.float32)
    gamma = 1.0 + 0.1 * jax.random.normal(k4, (2 * latent_dim,), dtype=jnp.float32)
    beta = 0.1 * jax.random.normal(k5, (2 * latent_dim,), dtype=jnp.float32)
    running_mean = 0.1 * jax.random.normal(k6, (2 * latent_dim,), dtype=jnp.float32)
    running_var = 0.5 + jnp.abs(jax.random.normal(k7, (2 * latent_dim,), dtype=jnp.float32))

    out = init_conv(x, w, b, gamma, beta, running_mean, running_var)
    out = jax.block_until_ready(out)

    # Reference matched to the kernel's bf16 GEMM inputs (f32 accumulation/epilogue) ...
    ref_bf16 = _ref_forward(x, w, b, gamma, beta, running_mean, running_var,
                            compute_dtype=jnp.bfloat16)
    # ... plus a looser sanity check against the pure f32 reference.
    ref_f32 = _ref_forward(x, w, b, gamma, beta, running_mean, running_var)

    assert out.shape == (N, latent_dim, 4, 4) and out.dtype == x.dtype
    assert jnp.allclose(out, ref_bf16, atol=2e-3, rtol=2e-3)
    assert jnp.allclose(out, ref_f32, atol=3e-2, rtol=3e-2)

    print("KERNEL_OK")
</pallas_src>

<mosaic_0001>
module attributes {stable_mosaic.version = 11 : i64} {
  func.func @_initconv_kernel(%arg0: i32, %arg1: i32, %arg2: memref<2x32xbf16, #tpu.memory_space<vmem>>, %arg3: memref<32x256xbf16, #tpu.memory_space<vmem>>, %arg4: memref<32x256xbf16, #tpu.memory_space<vmem>>, %arg5: memref<4x256xf32, #tpu.memory_space<vmem>>, %arg6: memref<2x256xf32, #tpu.memory_space<vmem>>) attributes {dimension_semantics = [#tpu.dimension_semantics<parallel>, #tpu.dimension_semantics<parallel>], iteration_bounds = array<i64: 2, 1>, scalar_prefetch = 0 : i64, scratch_operands = 0 : i64, tpu.core_type = #tpu.core_type<tc>, window_params = [{transform_indices = @transform_0, window_bounds = array<i64: 2, 32>}, {transform_indices = @transform_1, window_bounds = array<i64: 32, 256>}, {transform_indices = @transform_2, window_bounds = array<i64: 32, 256>}, {transform_indices = @transform_3, window_bounds = array<i64: 4, 256>}, {transform_indices = @transform_4, window_bounds = array<i64: 2, 256>}]} {
    %c0 = arith.constant 0 : index
    %c0_0 = arith.constant 0 : index
    %0 = vector.load %arg2[%c0, %c0_0] : memref<2x32xbf16, #tpu.memory_space<vmem>>, vector<2x32xbf16>
    %c0_1 = arith.constant 0 : index
    %c0_2 = arith.constant 0 : index
    %1 = vector.load %arg3[%c0_1, %c0_2] : memref<32x256xbf16, #tpu.memory_space<vmem>>, vector<32x256xbf16>
    %cst = arith.constant dense<0.000000e+00> : vector<2x256xf32>
    %2 = tpu.matmul %0, %1, %cst {dimension_numbers = #tpu.dot_dimension_numbers<[1], [0], [0], [1], [0, 0, 1, 1], [], []>} : vector<2x32xbf16>, vector<32x256xbf16>, vector<2x256xf32> -> vector<2x256xf32>
    %c0_3 = arith.constant 0 : index
    %c0_4 = arith.constant 0 : index
    %3 = vector.load %arg4[%c0_3, %c0_4] : memref<32x256xbf16, #tpu.memory_space<vmem>>, vector<32x256xbf16>
    %cst_5 = arith.constant dense<0.000000e+00> : vector<2x256xf32>
    %4 = tpu.matmul %0, %3, %cst_5 {dimension_numbers = #tpu.dot_dimension_numbers<[1], [0], [0], [1], [0, 0, 1, 1], [], []>} : vector<2x32xbf16>, vector<32x256xbf16>, vector<2x256xf32> -> vector<2x256xf32>
    %c0_6 = arith.constant 0 : index
    %c0_7 = arith.constant 0 : index
    %5 = vector.load %arg5[%c0_6, %c0_7] : memref<4x256xf32, #tpu.memory_space<vmem>>, vector<1x256xf32>
    %6 = vector.broadcast %5 : vector<1x256xf32> to vector<2x256xf32>
    %7 = arith.mulf %2, %6 : vector<2x256xf32>
    %c1 = arith.constant 1 : index
    %c0_8 = arith.constant 0 : index
    %8 = vector.load %arg5[%c1, %c0_8] : memref<4x256xf32, #tpu.memory_space<vmem>>, vector<1x256xf32>
    %9 = vector.broadcast %8 : vector<1x256xf32> to vector<2x256xf32>
    %10 = arith.addf %7, %9 : vector<2x256xf32>
    %c2 = arith.constant 2 : index
    %c0_9 = arith.constant 0 : index
    %11 = vector.load %arg5[%c2, %c0_9] : memref<4x256xf32, #tpu.memory_space<vmem>>, vector<1x256xf32>
    %12 = vector.broadcast %11 : vector<1x256xf32> to vector<2x256xf32>
    %13 = arith.mulf %4, %12 : vector<2x256xf32>
    %c3 = arith.constant 3 : index
    %c0_10 = arith.constant 0 : index
    %14 = vector.load %arg5[%c3, %c0_10] : memref<4x256xf32, #tpu.memory_space<vmem>>, vector<1x256xf32>
    %15 = vector.broadcast %14 : vector<1x256xf32> to vector<2x256xf32>
    %16 = arith.addf %13, %15 : vector<2x256xf32>
    %17 = arith.negf %16 : vector<2x256xf32>
    %18 = math.exp %17 : vector<2x256xf32>
    %cst_11 = arith.constant 1.000000e+00 : f32
    %19 = vector.broadcast %cst_11 : f32 to vector<2x256xf32>
    %20 = arith.addf %19, %18 : vector<2x256xf32>
    %21 = arith.divf %19, %20 : vector<2x256xf32>
    %22 = arith.mulf %10, %21 : vector<2x256xf32>
    %c0_12 = arith.constant 0 : index
    %c0_13 = arith.constant 0 : index
    %23 = vector.load %arg6[%c0_12, %c0_13] : memref<2x256xf32, #tpu.memory_space<vmem>>, vector<2x256xf32>
    tpu.vector_store %arg6[%c0_12, %c0_13], %22 {strides = array<i32>} : memref<2x256xf32, #tpu.memory_space<vmem>>, vector<2x256xf32>,
    return
  }
  func.func @transform_0(%arg0: i32, %arg1: i32) -> (i32, i32) {
    %c0_i32 = arith.constant 0 : i32
    %c0_i32_0 = arith.constant 0 : i32
    return %arg1, %c0_i32 : i32, i32
  }
  func.func @transform_1(%arg0: i32, %arg1: i32) -> (i32, i32) {
    %c0_i32 = arith.constant 0 : i32
    %c0_i32_0 = arith.constant 0 : i32
    return %c0_i32, %arg0 : i32, i32
  }
  func.func @transform_2(%arg0: i32, %arg1: i32) -> (i32, i32) {
    %c2_i32 = arith.constant 2 : i32
    %0 = arith.addi %arg0, %c2_i32 : i32
    %c0_i32 = arith.constant 0 : i32
    %c0_i32_0 = arith.constant 0 : i32
    return %c0_i32, %0 : i32, i32
  }
  func.func @transform_3(%arg0: i32, %arg1: i32) -> (i32, i32) {
    %c0_i32 = arith.constant 0 : i32
    %c0_i32_0 = arith.constant 0 : i32
    return %c0_i32, %arg0 : i32, i32
  }
  func.func @transform_4(%arg0: i32, %arg1: i32) -> (i32, i32) {
    %c0_i32 = arith.constant 0 : i32
    return %arg1, %arg0 : i32, i32
  }
}

</mosaic_0001>

<llo_original>
// kernel: tpu_custom_call.1
$region0: #{tpu_custom_call.1}
  #allocation0 [shape = 'u32[]', space=smem, size = 0x4, offset = 0x4, fixed_abs, tag = 'smem constant byte address 0x4 - core index']
  #allocation1 [shape = 'u32[72,128]{1,0:T(1,128)}', space=vmem, size = 0x9000, scoped, tag = 'internal scratch']
  %s0 = inlined_call_operand.hbm [shape: bf16[2,32], index: 0, kind: input, shape index: {}]
  %s1 = inlined_call_operand.hbm [shape: bf16[32,1024], index: 1, kind: input, shape index: {}]
  %s2 = inlined_call_operand.hbm [shape: bf16[32,1024], index: 2, kind: input, shape index: {}]
  %s3 = inlined_call_operand.hbm [shape: f32[4,512], index: 3, kind: input, shape index: {}]
  %s4 = inlined_call_operand.hbm [shape: f32[2,512], index: 4, kind: output, shape index: {}]
  %s5 = sld [smem:[#allocation0]]
  $region65: #{tpu_custom_call.1} parent=0
    _
  %s7 = ssub.s32 1, %s5
  %s8 = scalar_select 0, %s7, %s5
  $region1: #{tpu_custom_call.1} parent=0
    #allocation2 [shape = 'u8[512]{0}', space=vmem, size = 0x400, scoped, tag = 'input window, operand 0, single buffered']
    #allocation3 [shape = 's32[2]{0}', space=sflag, size = 0x8, scoped, tag = 'scoped memory for tpu_custom_call.1']
    #allocation4 [shape = 's32[2]{0}', space=sflag, size = 0x8, scoped, tag = 'scoped memory for tpu_custom_call.1']
    #allocation5 [shape = 'u8[32768]{0}', space=vmem, size = 0x8000, scoped, tag = 'input window, operand 1']
    #allocation6 [shape = 's32[2]{0}', space=sflag, size = 0x8, scoped, tag = 'scoped memory for tpu_custom_call.1']
    #allocation7 [shape = 'u8[32768]{0}', space=vmem, size = 0x8000, scoped, tag = 'input window, operand 2']
    #allocation8 [shape = 'u8[8192]{0}', space=vmem, size = 0x2000, scoped, tag = 'input window, operand 3']
    #allocation9 [shape = 's32[2]{0}', space=sflag, size = 0x8, scoped, tag = 'scoped memory for tpu_custom_call.1']
    #allocation10 [shape = 'u8[4096]{0}', space=vmem, size = 0x1000, scoped, tag = 'output window, operand 0']
    %9 = vsyncpa [#allocation3], 0
    %10 = vsyncpa [#allocation6], 0
    %s11 = scalar_lea.sflag [#allocation6], 1
    %12 = vsyncpa %s11, 0
    %13 = vsyncpa [#allocation9], 0
    %s14 = scalar_lea.sflag [#allocation9], 1
    %15 = vsyncpa %s14, 0
    %16 = vsyncpa [#allocation4], 0
    %s17 = scalar_lea.sflag [#allocation4], 1
    %18 = vsyncpa %s17, 0
    loop: start=0, step=1, limit=4
    $region2: #{tpu_custom_call.1} parent=1 // loop_pre_header
      _
    $region3: #{tpu_custom_call.1} parent=1 // loop_header
      %s20 = sphi 0, %s24
      %p21 = scmp.ge.s32.totalorder %s20, 4
      %s27 = sphi 0, %s39
      %s28 = sphi 0, %s35
      %s29 = sphi 0, %s27
      %s30 = sphi 0, %s28
      %s31 = sphi 0, %s29
      %s32 = sphi 0, %s30
      %s42 = sphi 0, %s44
      %s45 = sphi 0, %s42
      %s46 = sphi 0, %s45
      %s62 = sphi 0, %s46
      %s68 = sphi 0, %s70
      %s71 = sphi 0, %s68
      %s72 = sphi 0, %s71
      %s88 = sphi 0, %s72
      %s96 = sphi 0, %s98
      %s99 = sphi 0, %s96
      %s100 = sphi 0, %s99
      %s116 = sphi 0, %s100
      %s122 = sphi 0, %s124
      %s125 = sphi 0, %s122
      %s126 = sphi 0, %s125
      %s142 = sphi 0, %s126
      %s150 = sphi 0, %s152
      %s153 = sphi 0, %s150
      %s154 = sphi 0, %s153
      %s170 = sphi 0, %s154
    $region4: #{tpu_custom_call.1} parent=1 // loop_header_branch
      %23 = sbr.rel (%p21) target = $region8
    $region5: #{tpu_custom_call.1} parent=1 // loop_body
      %s25 = ssub.s32 %s20, 1
      %s26 = ssub.s32 %s20, 2
      %s33 = sadd.s32 1, %s28
      %p34 = scmp.ge.s32.totalorder %s33, 1
      %s35 = scalar_select %p34, 0, %s33
      %s36 = sadd.s32 1, %s27
      %s37 = scalar_select %p34, %s36, %s27
      %p38 = scmp.ge.s32.totalorder %s37, 2
      %s39 = scalar_select %p38, 0, %s37
      %s40 = ssub.s32 %s28, %s35
      %p41 = scmp.eq.s32.totalorder %s40, 0
      %s43 = sadd.s32 %s42, 1
      %s44 = scalar_select %p41, %s42, %s43
      %p47 = pneg %p41
      %p48 = scmp.eq.s32.totalorder %s20, 1
      %p49 = por %p47, %p48
      %p50 = scmp.ne.s32.totalorder %s42, %s45
      %p51 = scmp.eq.s32.totalorder %s20, 0
      %p52 = por %p50, %p51
      %p53 = scmp.ne.s32.totalorder %s42, %s45
      %p54 = scmp.eq.s32.totalorder %s25, 1
      %p55 = por %p53, %p54
      %p56 = scmp.ne.s32.totalorder %s45, %s46
      %p57 = scmp.eq.s32.totalorder %s25, 0
      %p58 = por %p56, %p57
      %p59 = scmp.ne.s32.totalorder %s45, %s46
      %p60 = scmp.eq.s32.totalorder %s26, 1
      %p61 = por %p59, %p60
      %p63 = scmp.ne.s32.totalorder %s46, %s62
      %p64 = scmp.eq.s32.totalorder %s26, 0
      %p65 = por %p63, %p64
      %s66 = ssub.s32 %s27, %s39
      %p67 = scmp.eq.s32.totalorder %s66, 0
      %s69 = sadd.s32 %s68, 1
      %s70 = scalar_select %p67, %s68, %s69
      %p73 = pneg %p67
      %p74 = scmp.eq.s32.totalorder %s20, 1
      %p75 = por %p73, %p74
      %p76 = scmp.ne.s32.totalorder %s68, %s71
      %p77 = scmp.eq.s32.totalorder %s20, 0
      %p78 = por %p76, %p77
      %p79 = scmp.ne.s32.totalorder %s68, %s71
      %p80 = scmp.eq.s32.totalorder %s25, 1
      %p81 = por %p79, %p80
      %p82 = scmp.ne.s32.totalorder %s71, %s72
      %p83 = scmp.eq.s32.totalorder %s25, 0
      %p84 = por %p82, %p83
      %p85 = scmp.ne.s32.totalorder %s71, %s72
      %p86 = scmp.eq.s32.totalorder %s26, 1
      %p87 = por %p85, %p86
      %p89 = scmp.ne.s32.totalorder %s72, %s88
      %p90 = scmp.eq.s32.totalorder %s26, 0
      %p91 = por %p89, %p90
      %s92 = sadd.s32 %s27, 2
      %s93 = sadd.s32 %s39, 2
      %s94 = ssub.s32 %s92, %s93
      %p95 = scmp.eq.s32.totalorder %s94, 0
      %s97 = sadd.s32 %s96, 1
      %s98 = scalar_select %p95, %s96, %s97
      %p101 = pneg %p95
      %p102 = scmp.eq.s32.totalorder %s20, 1
      %p103 = por %p101, %p102
      %p104 = scmp.ne.s32.totalorder %s96, %s99
      %p105 = scmp.eq.s32.totalorder %s20, 0
      %p106 = por %p104, %p105
      %p107 = scmp.ne.s32.totalorder %s96, %s99
      %p108 = scmp.eq.s32.totalorder %s25, 1
      %p109 = por %p107, %p108
      %p110 = scmp.ne.s32.totalorder %s99, %s100
      %p111 = scmp.eq.s32.totalorder %s25, 0
      %p112 = por %p110, %p111
      %p113 = scmp.ne.s32.totalorder %s99, %s100
      %p114 = scmp.eq.s32.totalorder %s26, 1
      %p115 = por %p113, %p114
      %p117 = scmp.ne.s32.totalorder %s100, %s116
      %p118 = scmp.eq.s32.totalorder %s26, 0
      %p119 = por %p117, %p118
      %s120 = ssub.s32 %s27, %s39
      %p121 = scmp.eq.s32.totalorder %s120, 0
      %s123 = sadd.s32 %s122, 1
      %s124 = scalar_select %p121, %s122, %s123
      %p127 = pneg %p121
      %p128 = scmp.eq.s32.totalorder %s20, 1
      %p129 = por %p127, %p128
      %p130 = scmp.ne.s32.totalorder %s122, %s125
      %p131 = scmp.eq.s32.totalorder %s20, 0
      %p132 = por %p130, %p131
      %p133 = scmp.ne.s32.totalorder %s122, %s125
      %p134 = scmp.eq.s32.totalorder %s25, 1
      %p135 = por %p133, %p134
      %p136 = scmp.ne.s32.totalorder %s125, %s126
      %p137 = scmp.eq.s32.totalorder %s25, 0
      %p138 = por %p136, %p137
      %p139 = scmp.ne.s32.totalorder %s125, %s126
      %p140 = scmp.eq.s32.totalorder %s26, 1
      %p141 = por %p139, %p140
      %p143 = scmp.ne.s32.totalorder %s126, %s142
      %p144 = scmp.eq.s32.totalorder %s26, 0
      %p145 = por %p143, %p144
      %s146 = ssub.s32 %s28, %s35
      %s147 = ssub.s32 %s27, %s39
      %s148 = sor.u32 %s146, %s147
      %p149 = scmp.eq.s32.totalorder %s148, 0
      %s151 = sadd.s32 %s150, 1
      %s152 = scalar_select %p149, %s150, %s151
      %p155 = pneg %p149
      %p156 = scmp.eq.s32.totalorder %s20, 1
      %p157 = por %p155, %p156
      %p158 = scmp.ne.s32.totalorder %s150, %s153
      %p159 = scmp.eq.s32.totalorder %s20, 0
      %p160 = por %p158, %p159
      %p161 = scmp.ne.s32.totalorder %s150, %s153
      %p162 = scmp.eq.s32.totalorder %s25, 1
      %p163 = por %p161, %p162
      %p164 = scmp.ne.s32.totalorder %s153, %s154
      %p165 = scmp.eq.s32.totalorder %s25, 0
      %p166 = por %p164, %p165
      %p167 = scmp.ne.s32.totalorder %s153, %s154
      %p168 = scmp.eq.s32.totalorder %s26, 1
      %p169 = por %p167, %p168
      %p171 = scmp.ne.s32.totalorder %s154, %s170
      %p172 = scmp.eq.s32.totalorder %s26, 0
      %p173 = por %p171, %p172
      %p174 = scmp.le.s32.totalorder 1, %s20
      %p175 = scmp.lt.s32.totalorder %s20, 3
      %p176 = pnand %p174, %p175
      %p177 = pneg %p176
      // Predicated region
      $region9: #{tpu_custom_call.1} parent=5 // pred_check
        _
      $region10: #{tpu_custom_call.1} parent=5 // pred_check_branch
        %179 = sbr.rel (%p176) target = $region12
      $region11: #{tpu_custom_call.1} parent=5 // pred_region
        %s180 = ssub.s32 %s20, 1
        // Predicated region
        $region13: #{tpu_custom_call.1} parent=11 // pred_check
          %p181 = pneg %p58
        $region14: #{tpu_custom_call.1} parent=11 // pred_check_branch
          %183 = sbr.rel (%p181) target = $region16
        $region15: #{tpu_custom_call.1} parent=11 // pred_region
          %185 = vsyncadd [#allocation3], 0
          %s186 = scalar_lea.hbm %s0, %s30
          %s188 = sshll.u32 %s186, 4
          %s189 = int_to_ptr.hbm [resolvable:$true] %s188
          %s190 = sshll.u32 [#allocation2], 4
          %s191 = int_to_ptr.vmem [resolvable:$true] %s190
          %193 = dma.hbm_to_vmem [thread:$0]  %s189, 16, %s191, [#allocation3]
        $region16: #{tpu_custom_call.1} parent=11 // pred_fallthru
          _
      $region12: #{tpu_custom_call.1} parent=5 // pred_fallthru
        _
      %p194 = scmp.lt.s32.totalorder %s20, 2
      // Predicated region
      $region17: #{tpu_custom_call.1} parent=5 // pred_check
        %p195 = pneg %p194
      $region18: #{tpu_custom_call.1} parent=5 // pred_check_branch
        %197 = sbr.rel (%p195) target = $region20
      $region19: #{tpu_custom_call.1} parent=5 // pred_region
        // Predicated region
        $region21: #{tpu_custom_call.1} parent=19 // pred_check
          %p198 = pneg %p78
        $region22: #{tpu_custom_call.1} parent=19 // pred_check_branch
          %200 = sbr.rel (%p198) target = $region24
        $region23: #{tpu_custom_call.1} parent=19 // pred_region
          %s201 = sand.u32 %s20, 1
          %s202 = scalar_lea.sflag [#allocation6], %s201
          %s203 = sand.u32 %s68, 1
          %s204 = smul.addr %s203, 32
          %s205 = scalar_lea.vmem [#allocation5], %s204
          %s206 = smul.u32 2, %s27
          %208 = vsyncadd %s202, 0
          %s209 = smul.addr %s206, 4
          %s210 = scalar_lea.hbm %s1, %s209
          %s211 = sshll.u32 %s210, 4
          %s212 = int_to_ptr.hbm [resolvable:$true] %s211
          %s213 = sshll.u32 %s205, 4
          %s214 = int_to_ptr.vmem [resolvable:$true] %s213
          %219 = dma.hbm_to_vmem [thread:$0]  %s212, 512, %s214, %s202, 512, 128, 8
        $region24: #{tpu_custom_call.1} parent=19 // pred_fallthru
          _
        // Predicated region
        $region25: #{tpu_custom_call.1} parent=19 // pred_check
          %p220 = pneg %p106
        $region26: #{tpu_custom_call.1} parent=19 // pred_check_branch
          %222 = sbr.rel (%p220) target = $region28
        $region27: #{tpu_custom_call.1} parent=19 // pred_region
          %s223 = sand.u32 %s20, 1
          %s224 = scalar_lea.sflag [#allocation6], %s223
          %s225 = sand.u32 %s96, 1
          %s226 = smul.addr %s225, 32
          %s227 = scalar_lea.vmem [#allocation7], %s226
          %s228 = sadd.s32 %s27, 2
          %s229 = smul.u32 2, %s228
          %231 = vsyncadd %s224, 0
          %s232 = smul.addr %s229, 4
          %s233 = scalar_lea.hbm %s2, %s232
          %s234 = sshll.u32 %s233, 4
          %s235 = int_to_ptr.hbm [resolvable:$true] %s234
          %s236 = sshll.u32 %s227, 4
          %s237 = int_to_ptr.vmem [resolvable:$true] %s236
          %242 = dma.hbm_to_vmem [thread:$0]  %s235, 512, %s237, %s224, 512, 128, 8
        $region28: #{tpu_custom_call.1} parent=19 // pred_fallthru
          _
        // Predicated region
        $region29: #{tpu_custom_call.1} parent=19 // pred_check
          %p243 = pneg %p132
        $region30: #{tpu_custom_call.1} parent=19 // pred_check_branch
          %245 = sbr.rel (%p243) target = $region32
        $region31: #{tpu_custom_call.1} parent=19 // pred_region
          %s246 = sand.u32 %s122, 1
          %s247 = scalar_lea.sflag [#allocation9], %s246
          %s248 = sand.u32 %s122, 1
          %s249 = smul.addr %s248, 8
          %s250 = scalar_lea.vmem [#allocation8], %s249
          %s251 = smul.u32 2, %s27
          %253 = vsyncadd %s247, 0
          %s254 = smul.addr %s251, 4
          %s255 = scalar_lea.hbm %s3, %s254
          %s257 = sshll.u32 %s255, 4
          %s258 = int_to_ptr.hbm [resolvable:$true] %s257
          %s259 = sshll.u32 %s250, 4
          %s260 = int_to_ptr.vmem [resolvable:$true] %s259
          %262 = dma.hbm_to_vmem [thread:$0]  %s258, 128, %s260, %s247
        $region32: #{tpu_custom_call.1} parent=19 // pred_fallthru
          _
      $region20: #{tpu_custom_call.1} parent=5 // pred_fallthru
        _
      %p263 = scmp.le.s32.totalorder 1, %s20
      %p264 = scmp.lt.s32.totalorder %s20, 3
      %p265 = pnand %p263, %p264
      %p266 = pneg %p265
      // Predicated region
      $region33: #{tpu_custom_call.1} parent=5 // pred_check
        _
      $region34: #{tpu_custom_call.1} parent=5 // pred_check_branch
        %268 = sbr.rel (%p265) target = $region36
      $region35: #{tpu_custom_call.1} parent=5 // pred_region
        %s269 = ssub.s32 %s20, 1
        // Predicated region
        $region37: #{tpu_custom_call.1} parent=35 // pred_check
          %p270 = pneg %p58
        $region38: #{tpu_custom_call.1} parent=35 // pred_check_branch
          %272 = sbr.rel (%p270) target = $region40
        $region39: #{tpu_custom_call.1} parent=35 // pred_region
          %274 = dma.done [#allocation3], 16
        $region40: #{tpu_custom_call.1} parent=35 // pred_fallthru
          _
        %s275 = sand.u32 %s25, 1
        %s276 = scalar_lea.sflag [#allocation6], %s275
        %s277 = sand.u32 %s71, 1
        %s278 = smul.addr %s277, 32
        %s279 = scalar_lea.vmem [#allocation5], %s278
        // Predicated region
        $region41: #{tpu_custom_call.1} parent=35 // pred_check
          %p280 = pneg %p84
        $region42: #{tpu_custom_call.1} parent=35 // pred_check_branch
          %282 = sbr.rel (%p280) target = $region44
        $region43: #{tpu_custom_call.1} parent=35 // pred_region
          %284 = dma.done %s276, 512
        $region44: #{tpu_custom_call.1} parent=35 // pred_fallthru
          _
        %s285 = sand.u32 %s25, 1
        %s286 = scalar_lea.sflag [#allocation6], %s285
        %s287 = sand.u32 %s99, 1
        %s288 = smul.addr %s287, 32
        %s289 = scalar_lea.vmem [#allocation7], %s288
        // Predicated region
        $region45: #{tpu_custom_call.1} parent=35 // pred_check
          %p290 = pneg %p112
        $region46: #{tpu_custom_call.1} parent=35 // pred_check_branch
          %292 = sbr.rel (%p290) target = $region48
        $region47: #{tpu_custom_call.1} parent=35 // pred_region
          %294 = dma.done %s286, 512
        $region48: #{tpu_custom_call.1} parent=35 // pred_fallthru
          _
        %s295 = sand.u32 %s125, 1
        %s296 = scalar_lea.sflag [#allocation9], %s295
        %s297 = sand.u32 %s125, 1
        %s298 = smul.addr %s297, 8
        %s299 = scalar_lea.vmem [#allocation8], %s298
        // Predicated region
        $region49: #{tpu_custom_call.1} parent=35 // pred_check
          %p300 = pneg %p138
        $region50: #{tpu_custom_call.1} parent=35 // pred_check_branch
          %302 = sbr.rel (%p300) target = $region52
        $region51: #{tpu_custom_call.1} parent=35 // pred_region
          %304 = dma.done %s296, 128
        $region52: #{tpu_custom_call.1} parent=35 // pred_fallthru
          _
        %p305 = pneg %p58
        %p306 = pneg %p55
        %s307 = sand.u32 %s25, 1
        %s308 = scalar_lea.sflag [#allocation6], %s307
        %s309 = sand.u32 %s71, 1
        %s310 = smul.addr %s309, 32
        %s311 = scalar_lea.vmem [#allocation5], %s310
        %p312 = pneg %p84
        %p313 = pneg %p81
        %s314 = sand.u32 %s25, 1
        %s315 = scalar_lea.sflag [#allocation6], %s314
        %s316 = sand.u32 %s99, 1
        %s317 = smul.addr %s316, 32
        %s318 = scalar_lea.vmem [#allocation7], %s317
        %p319 = pneg %p112
        %p320 = pneg %p109
        %s321 = sand.u32 %s125, 1
        %s322 = scalar_lea.sflag [#allocation9], %s321
        %s323 = sand.u32 %s125, 1
        %s324 = smul.addr %s323, 8
        %s325 = scalar_lea.vmem [#allocation8], %s324
        %p326 = pneg %p138
        %p327 = pneg %p135
        %p328 = pneg %p166
        %p329 = pneg %p163
        %s330 = sand.u32 %s153, 1
        %s331 = scalar_lea.sflag [#allocation4], %s330
        %s332 = sand.u32 %s153, 1
        %s333 = smul.addr %s332, 4
        %s334 = scalar_lea.vmem [#allocation10], %s333
        %s335 = smul.u32 2, %s29
        %s336 = sadd.s32 %s29, 2
        %s337 = smul.u32 2, %s336
        %s338 = smul.u32 2, %s29
        %s339 = smul.u32 2, %s29
        %v341 = vld [vmem:[#allocation2] sm:$0x1]
        %v342 = vld [vmem:[%s279] sm:$0xff]
        %v343 = vld [vmem:[%s279 + $0x8] sm:$0xff]
        %v344 = vld [vmem:[%s279 + $0x10] sm:$0xff]
        %v345 = vld [vmem:[%s279 + $0x18] sm:$0xff]
        %v350 = vunpack.c.l.b16 %v342
        %v351 = vunpack.c.h.b16 %v342
        %v352 = vunpack.c.l.b16 %v343
        %v353 = vunpack.c.h.b16 %v343
        %v354 = vunpack.c.l.b16 %v344
        %v355 = vunpack.c.h.b16 %v344
        %v356 = vunpack.c.l.b16 %v345
        %v357 = vunpack.c.h.b16 %v345
        %v358 = vpack.c.b16 %v352, %v350
        %v359 = vpack.c.b16 %v353, %v351
        %v360 = vpack.c.b16 %v356, %v354
        %v361 = vpack.c.b16 %v357, %v355
        %vm366 = vcmask 261120
        %v368 = vsel %vm366, %v341, 0
        %370 = vmatpush.bf16.msra.mxu0 0
        %371 = vmatpush.bf16.msra.mxu0 0
        %372 = vmatpush.bf16.msra.mxu0 0
        %373 = vmatpush.bf16.msra.mxu0 0
        %374 = vmatpush.bf16.msra.mxu0 0
        %375 = vmatpush.bf16.msra.mxu0 0
        %376 = vmatpush.bf16.msra.mxu0 %v360
        %377 = vmatpush.bf16.msra.mxu0 %v358
        %378 = vmatmul.bf16.gmra.mxu0 %v368
        %v379 = vpop.f32.mrf.mxu0
        %v380 = vadd.f32 0.0, %v379
        %v381 = vpop.f32.mrf.mxu0
        %382 = vdwg.mxu0
        %383 = vmatpush.bf16.msra.mxu0 0
        %384 = vmatpush.bf16.msra.mxu0 0
        %385 = vmatpush.bf16.msra.mxu0 0
        %386 = vmatpush.bf16.msra.mxu0 0
        %387 = vmatpush.bf16.msra.mxu0 0
        %388 = vmatpush.bf16.msra.mxu0 0
        %389 = vmatpush.bf16.msra.mxu0 %v361
        %390 = vmatpush.bf16.msra.mxu0 %v359
        %391 = vmatmul.bf16.gmra.mxu0 %v368
        %v392 = vpop.f32.mrf.mxu0
        %v393 = vadd.f32 0.0, %v392
        %v394 = vpop.f32.mrf.mxu0
        %395 = vdwg.mxu0
        %v396 = vld [vmem:[%s289] sm:$0xff]
        %v397 = vld [vmem:[%s289 + $0x8] sm:$0xff]
        %v398 = vld [vmem:[%s289 + $0x10] sm:$0xff]
        %v399 = vld [vmem:[%s289 + $0x18] sm:$0xff]
        %v404 = vunpack.c.l.b16 %v396
        %v405 = vunpack.c.h.b16 %v396
        %v406 = vunpack.c.l.b16 %v397
        %v407 = vunpack.c.h.b16 %v397
        %v408 = vunpack.c.l.b16 %v398
        %v409 = vunpack.c.h.b16 %v398
        %v410 = vunpack.c.l.b16 %v399
        %v411 = vunpack.c.h.b16 %v399
        %v412 = vpack.c.b16 %v406, %v404
        %v413 = vpack.c.b16 %v407, %v405
        %v414 = vpack.c.b16 %v410, %v408
        %v415 = vpack.c.b16 %v411, %v409
        %420 = vmatpush.bf16.msra.mxu0 0
        %421 = vmatpush.bf16.msra.mxu0 0
        %422 = vmatpush.bf16.msra.mxu0 0
        %423 = vmatpush.bf16.msra.mxu0 0
        %424 = vmatpush.bf16.msra.mxu0 0
        %425 = vmatpush.bf16.msra.mxu0 0
        %426 = vmatpush.bf16.msra.mxu0 %v414
        %427 = vmatpush.bf16.msra.mxu0 %v412
        %428 = vmatmul.bf16.gmra.mxu0 %v368
        %v429 = vpop.f32.mrf.mxu0
        %v430 = vadd.f32 0.0, %v429
        %v431 = vpop.f32.mrf.mxu0
        %432 = vdwg.mxu0
        %433 = vmatpush.bf16.msra.mxu0 0
        %434 = vmatpush.bf16.msra.mxu0 0
        %435 = vmatpush.bf16.msra.mxu0 0
        %436 = vmatpush.bf16.msra.mxu0 0
        %437 = vmatpush.bf16.msra.mxu0 0
        %438 = vmatpush.bf16.msra.mxu0 0
        %439 = vmatpush.bf16.msra.mxu0 %v415
        %440 = vmatpush.bf16.msra.mxu0 %v413
        %441 = vmatmul.bf16.gmra.mxu0 %v368
        %v442 = vpop.f32.mrf.mxu0
        %v443 = vadd.f32 0.0, %v442
        %v444 = vpop.f32.mrf.mxu0
        %445 = vdwg.mxu0
        %v446 = vld [vmem:[%s299] ss:$4 sm:$0x3]
        %v448 = vperm.slane %v446, 0
        %v449 = vperm.slane %v446, 1
        %v452 = vmul.f32 %v380, %v448
        %v453 = vmul.f32 %v393, %v449
        %s454 = scalar_lea.vmem %s299, 1 [#allocation8]
        %v455 = vld [vmem:[%s454] ss:$4 sm:$0x3]
        %v457 = vperm.slane %v455, 0
        %v458 = vperm.slane %v455, 1
        %v461 = vadd.f32 %v452, %v457
        %v462 = vadd.f32 %v453, %v458
        %s463 = scalar_lea.vmem %s299, 2 [#allocation8]
        %v464 = vld [vmem:[%s463] ss:$4 sm:$0x3]
        %v466 = vperm.slane %v464, 0
        %v467 = vperm.slane %v464, 1
        %v470 = vmul.f32 %v430, %v466
        %v471 = vmul.f32 %v443, %v467
        %s472 = scalar_lea.vmem %s299, 3 [#allocation8]
        %v473 = vld [vmem:[%s472] ss:$4 sm:$0x3]
        %v475 = vperm.slane %v473, 0
        %v476 = vperm.slane %v473, 1
        %v479 = vadd.f32 %v470, %v475
        %v480 = vadd.f32 %v471, %v476
        %v481 = vxor.u32 %v479, 2147483648
        %v482 = vxor.u32 %v480, 2147483648
        %v483 = vmul.f32 %v481, 1.442695
        %v484 = vpow.pop %v483
        %v485 = vmul.f32 %v482, 1.442695
        %v486 = vpow.pop %v485
        %v487 = vadd.f32 %v484, 1.0
        %v488 = vadd.f32 %v486, 1.0
        %v489 = vrcp.pop %v487
        %v490 = vmul.f32 %v487, %v489
        %v491 = vsub.f32 1.0, %v490
        %v492 = vmul.f32 %v489, %v491
        %v493 = vadd.f32 %v489, %v492
        %vm494 = vweird.f32 %v487
        %vm495 = vweird.f32 %v489
        %vm496 = vmor %vm494, %vm495
        %v497 = vsel %vm496, %v489, %v493
        %v498 = vand.u32 2147483647, %v487
        %vm499 = vcmp.eq.f32.partialorder %v498, 8.507059e+37
        %v500 = vand.u32 %v487, 2147483648
        %v501 = vor.u32 1.1754944e-38, %v500
        %v502 = vsel %vm499, %v501, %v497
        %v503 = vmul.f32 1.0, %v502
        %v504 = vrcp.pop %v488
        %v505 = vmul.f32 %v488, %v504
        %v506 = vsub.f32 1.0, %v505
        %v507 = vmul.f32 %v504, %v506
        %v508 = vadd.f32 %v504, %v507
        %vm509 = vweird.f32 %v488
        %vm510 = vweird.f32 %v504
        %vm511 = vmor %vm509, %vm510
        %v512 = vsel %vm511, %v504, %v508
        %v513 = vand.u32 2147483647, %v488
        %vm514 = vcmp.eq.f32.partialorder %v513, 8.507059e+37
        %v515 = vand.u32 %v488, 2147483648
        %v516 = vor.u32 1.1754944e-38, %v515
        %v517 = vsel %vm514, %v516, %v512
        %v518 = vmul.f32 1.0, %v517
        %v519 = vmul.f32 %v461, %v503
        %v520 = vmul.f32 %v462, %v518
        %v523 = vrot.slane %v520, 6
        %vm524 = vcmask 1041408
        %v525 = vsel %vm524, %v519, %v523
        %527 = vst [vmem:[%s334] sm:$0xf] %v525
        %s528 = sand.u32 %s153, 1
        %s529 = scalar_lea.sflag [#allocation4], %s528
        %s530 = sand.u32 %s153, 1
        %s531 = smul.addr %s530, 4
        %s532 = scalar_lea.vmem [#allocation10], %s531
        // Predicated region
        $region53: #{tpu_custom_call.1} parent=35 // pred_check
          %p533 = pneg %p163
        $region54: #{tpu_custom_call.1} parent=35 // pred_check_branch
          %535 = sbr.rel (%p533) target = $region56
        $region55: #{tpu_custom_call.1} parent=35 // pred_region
          %s536 = smul.u32 2, %s29
          %538 = vsyncadd %s529, 0
          %s539 = smul.addr %s30, 4
          %s540 = sadd.s32 %s536, %s539
          %s541 = smul.addr %s540, 2
          %s542 = scalar_lea.hbm %s4, %s541
          %s544 = sshll.u32 %s532, 4
          %s545 = int_to_ptr.vmem [resolvable:$true] %s544
          %s546 = sshll.u32 %s542, 4
          %s547 = int_to_ptr.hbm [resolvable:$true] %s546
          %549 = dma.vmem_to_hbm [thread:$0]  %s545, 64, %s547, %s529
        $region56: #{tpu_custom_call.1} parent=35 // pred_fallthru
          _
      $region36: #{tpu_custom_call.1} parent=5 // pred_fallthru
        _
      %p550 = scmp.le.s32.totalorder 2, %s20
      // Predicated region
      $region57: #{tpu_custom_call.1} parent=5 // pred_check
        %p551 = pneg %p550
      $region58: #{tpu_custom_call.1} parent=5 // pred_check_branch
        %553 = sbr.rel (%p551) target = $region60
      $region59: #{tpu_custom_call.1} parent=5 // pred_region
        %s554 = ssub.s32 %s20, 2
        // Predicated region
        $region61: #{tpu_custom_call.1} parent=59 // pred_check
          %p555 = pneg %p169
        $region62: #{tpu_custom_call.1} parent=59 // pred_check_branch
          %557 = sbr.rel (%p555) target = $region64
        $region63: #{tpu_custom_call.1} parent=59 // pred_region
          %s558 = sand.u32 %s154, 1
          %s559 = scalar_lea.sflag [#allocation4], %s558
          %s560 = sand.u32 %s154, 1
          %s561 = smul.addr %s560, 4
          %s562 = scalar_lea.vmem [#allocation10], %s561
          %564 = dma.done %s559, 64
        $region64: #{tpu_custom_call.1} parent=59 // pred_fallthru
          _
      $region60: #{tpu_custom_call.1} parent=5 // pred_fallthru
        _
    $region6: #{tpu_custom_call.1} parent=1 // loop_footer
      %s24 = sadd.s32 1, %s20
    $region7: #{tpu_custom_call.1} parent=1 // loop_footer_branch
      %19 = sbr.rel target = $region3
    $region8: #{tpu_custom_call.1} parent=1 // loop_exit
      _
    %565 = vsyncpa [#allocation3], 1
    %s566 = scalar_lea.sflag [#allocation3], 1
    %567 = vsyncpa %s566, 1
    %568 = vsyncpa [#allocation6], 1
    %s569 = scalar_lea.sflag [#allocation6], 1
    %570 = vsyncpa %s569, 1
    %571 = vsyncpa [#allocation9], 1
    %s572 = scalar_lea.sflag [#allocation9], 1
    %573 = vsyncpa %s572, 1
    %574 = vsyncpa [#allocation4], 1
    %s575 = scalar_lea.sflag [#allocation4], 1
    %576 = vsyncpa %s575, 1

</llo_original>
